<compile_context>
chip_gen: v7x
topology: tpu7x:2x2x1
jax: 0.10.0
libtpu: 0.0.40
codegen_flags: <defaults>
</compile_context>

<pallas_src>
import functools

import jax
import jax.numpy as jnp
from jax.experimental import pallas as pl
from jax.experimental.pallas import tpu as pltpu


def _round_up(x, m):
    return ((x + m - 1) // m) * m


# --------------------------------------------------------------------------------------
# Path A (small vocab, used by the demo): tables VMEM-resident, gather = dynamic vloads.
# --------------------------------------------------------------------------------------
def _trigram_kernel_vmem(idx1_ref, idxf_ref,       # scalar-prefetch (SMEM) gather indices
                         u_ref, bg_ref, tg_ref,    # alpha-scaled tables, VMEM resident
                         out_ref,                  # (row_tile, V_pad) output tile
                         bg_rows, tg_rows,         # VMEM scratch for gathered rows
                         *, row_tile, unroll):
    base = pl.program_id(0) * row_tile

    # Gather one bigram row + one trigram row per output position with dynamic in-VMEM
    # loads (no HBM DMA descriptors, no semaphore waits).  Partially unrolled so the
    # scalar index loads / address math of neighbouring rows can co-issue.
    @pl.loop(0, row_tile // unroll)
    def _gather(c):
        r0 = pl.multiple_of(c * unroll, unroll)
        for u in range(unroll):
            r = r0 + u
            b_idx = idx1_ref[base + r]
            t_idx = idxf_ref[base + r]
            bg_rows[pl.ds(r, 1), :] = bg_ref[pl.ds(b_idx, 1), :]
            tg_rows[pl.ds(r, 1), :] = tg_ref[pl.ds(t_idx, 1), :]

    # Alphas were folded into the tables by the wrapper -> add + add + log, lane-dense.
    out_ref[...] = jnp.log(u_ref[...] + bg_rows[...] + tg_rows[...])


# --------------------------------------------------------------------------------------
# Path B (large-vocab fallback): tables stay in HBM; rows gathered by chunked,
# double-buffered DMA overlapped with the add/log compute of the previous chunk.
# --------------------------------------------------------------------------------------
def _trigram_kernel_dma(idx1_ref, idxf_ref,        # scalar-prefetch (SMEM) gather indices
                        u_ref, bg_hbm, tg_hbm,     # unigram (VMEM) + tables (HBM)
                        out_ref,                   # (row_tile, V_pad) output tile
                        bg_buf, tg_buf, sem,       # (2, chunk, V_pad) buffers, DMA sems (2,2)
                        *, row_tile, chunk, unroll):
    base = pl.program_id(0) * row_tile
    n_chunks = row_tile // chunk

    def issue(c, slot):
        # One row DMA per (row, table); all rows of the chunk share the (table, slot) sem.
        r0 = base + c * chunk

        @pl.loop(0, chunk // unroll)
        def _issue(g):
            q0 = pl.multiple_of(g * unroll, unroll)
            for u in range(unroll):
                q = q0 + u
                b_idx = idx1_ref[r0 + q]
                t_idx = idxf_ref[r0 + q]
                pltpu.make_async_copy(bg_hbm.at[pl.ds(b_idx, 1), :],
                                      bg_buf.at[slot, pl.ds(q, 1), :],
                                      sem.at[0, slot]).start()
                pltpu.make_async_copy(tg_hbm.at[pl.ds(t_idx, 1), :],
                                      tg_buf.at[slot, pl.ds(q, 1), :],
                                      sem.at[1, slot]).start()

    def wait(slot):
        # ONE bulk wait per table per chunk: the descriptor spans the whole chunk buffer,
        # whose byte count equals the sum of the `chunk` identical row copies on this sem.
        pltpu.make_async_copy(bg_hbm.at[pl.ds(0, chunk), :], bg_buf.at[slot],
                              sem.at[0, slot]).wait()
        pltpu.make_async_copy(tg_hbm.at[pl.ds(0, chunk), :], tg_buf.at[slot],
                              sem.at[1, slot]).wait()

    u_blk = jnp.broadcast_to(u_ref[...], (chunk, u_ref.shape[-1]))   # hoisted out of the loop

    issue(0, 0)

    @pl.loop(0, n_chunks)
    def _pipeline(c):
        slot = c & 1

        @pl.when(c + 1 < n_chunks)
        def _():
            issue(c + 1, 1 - slot)          # prefetch next chunk while this one computes

        wait(slot)
        off = pl.multiple_of(c * chunk, chunk)
        out_ref[pl.ds(off, chunk), :] = jnp.log(u_blk + bg_buf[slot] + tg_buf[slot])


def trigram_forward(batch, unigram, bigram, trigram_flat, alphas, *,
                    row_tile=256, vmem_table_budget=28 * 1024 * 1024):
    """batch: (B, T) int32 token ids; returns (B, T, V) float32 log-probabilities."""
    B, T = batch.shape
    V = unigram.shape[-1]
    N = B * T
    a0, a1, a2 = (float(a) for a in alphas)

    V_pad = _round_up(V, 128)                                 # lane-dense vocab axis
    unroll = 8
    row_tile = max(8, (min(row_tile, _round_up(N, 8)) // 8) * 8)
    N_pad = _round_up(N, row_tile)
    grid = (N_pad // row_tile,)

    # ---- table prep: pad the vocab axis, append a uniform fallback row for truncated
    # ---- contexts, and fold the interpolation weights in once. ----
    u2d = jnp.pad((a0 * unigram.astype(jnp.float32)).reshape(1, V),
                  ((0, 0), (0, V_pad - V)), constant_values=a0 / V)
    bg = jnp.pad(a1 * bigram.astype(jnp.float32),
                 ((0, 0), (0, V_pad - V)), constant_values=a1 / V)
    bg = jnp.concatenate([bg, jnp.full((1, V_pad), a1 / V, jnp.float32)], axis=0)    # row V
    tg = jnp.pad(a2 * trigram_flat.astype(jnp.float32),
                 ((0, 0), (0, V_pad - V)), constant_values=a2 / V)
    tg = jnp.concatenate([tg, jnp.full((1, V_pad), a2 / V, jnp.float32)], axis=0)    # row V*V

    # ---- per-position gather indices (truncated contexts -> uniform fallback rows) ----
    flat = batch.reshape(N).astype(jnp.int32)
    pos = jnp.tile(jnp.arange(T, dtype=jnp.int32), (B,))
    prev1 = jnp.roll(flat, 1)
    prev2 = jnp.roll(flat, 2)
    idx1 = jnp.where(pos >= 1, prev1, V).astype(jnp.int32)                  # j == 0 -> uniform row
    idxf = jnp.where(pos >= 2, prev2 * V + prev1, V * V).astype(jnp.int32)  # j <  2 -> uniform row
    idx1 = jnp.pad(idx1, (0, N_pad - N))        # padded tail gathers row 0; sliced off below
    idxf = jnp.pad(idxf, (0, N_pad - N))

    # ---- pick path against a v7x-safe VMEM budget (tables are double-buffered by Pallas) ----
    tbl_bytes = 4 * V_pad * (1 + (V + 1) + (V * V + 1))
    blk_bytes = 4 * V_pad * row_tile * 4                       # out (x2 bufs) + 2 gather buffers
    use_vmem_tables = 2 * tbl_bytes + blk_bytes <= vmem_table_budget

    cost = pl.CostEstimate(
        flops=int(2 * N_pad * V_pad),
        transcendentals=int(N_pad * V_pad),
        bytes_accessed=int(4 * 3 * N_pad * V_pad + tbl_bytes),
    )

    if use_vmem_tables:
        kernel = functools.partial(_trigram_kernel_vmem, row_tile=row_tile, unroll=unroll)
        in_specs = [
            pl.BlockSpec((1, V_pad), lambda i, idx1, idxf: (0, 0)),           # unigram
            pl.BlockSpec((V + 1, V_pad), lambda i, idx1, idxf: (0, 0)),       # whole bigram
            pl.BlockSpec((V * V + 1, V_pad), lambda i, idx1, idxf: (0, 0)),   # whole trigram
        ]
        scratch_shapes = [
            pltpu.VMEM((row_tile, V_pad), jnp.float32),    # gathered bigram rows
            pltpu.VMEM((row_tile, V_pad), jnp.float32),    # gathered trigram rows
        ]
    else:
        # TODO(synk): for very large V (V_pad >~ 8K) also tile the vocab axis so the
        # (row_tile, V_pad) output block / chunk buffers stay inside the v7x VMEM budget.
        chunk = 32 if row_tile % 32 == 0 else 8
        kernel = functools.partial(_trigram_kernel_dma, row_tile=row_tile,
                                   chunk=chunk, unroll=unroll)
        in_specs = [
            pl.BlockSpec((1, V_pad), lambda i, idx1, idxf: (0, 0)),   # unigram (VMEM)
            pl.BlockSpec(memory_space=pl.ANY),                        # bigram table (HBM)
            pl.BlockSpec(memory_space=pl.ANY),                        # trigram table (HBM)
        ]
        scratch_shapes = [
            pltpu.VMEM((2, chunk, V_pad), jnp.float32),    # double-buffered bigram chunks
            pltpu.VMEM((2, chunk, V_pad), jnp.float32),    # double-buffered trigram chunks
            pltpu.SemaphoreType.DMA((2, 2)),               # (table, slot)
        ]

    out = pl.pallas_call(
        kernel,
        out_shape=jax.ShapeDtypeStruct((N_pad, V_pad), jnp.float32),
        grid_spec=pltpu.PrefetchScalarGridSpec(
            num_scalar_prefetch=2,
            grid=grid,
            in_specs=in_specs,
            out_specs=pl.BlockSpec((row_tile, V_pad), lambda i, idx1, idxf: (i, 0)),
            scratch_shapes=scratch_shapes,
        ),
        compiler_params=pltpu.CompilerParams(
            dimension_semantics=("parallel",),             # megacore-shardable on v7x
            vmem_limit_bytes=32 * 1024 * 1024,
        ),
        cost_estimate=cost,
    )(idx1, idxf, u2d, bg, tg)

    return out[:N, :V].reshape(B, T, V)


def _reference(batch, unigram, bigram, trigram_flat, alphas):
    B, T = batch.shape
    V = unigram.shape[-1]
    a0, a1, a2 = alphas
    out = jnp.zeros((B, T, V), jnp.float32)
    uni = jnp.full((V,), 1.0 / V, jnp.float32)
    for i in range(B):
        for j in range(T):
            p = a0 * unigram
            p = p + a1 * (bigram[batch[i, j - 1]] if j >= 1 else uni)
            p = p + a2 * (trigram_flat[batch[i, j - 2] * V + batch[i, j - 1]]
                          if j >= 2 else uni)
            out = out.at[i, j].set(p)
    return jnp.log(out)


if __name__ == "__main__":
    B, T, V = 2, 8, 128       # len(TEXT.vocab) == V; multiple of 128 keeps stores lane-dense

    key = jax.random.PRNGKey(0)
    k_batch, k_u, k_b, k_t = jax.random.split(key, 4)

    batch = jax.random.randint(k_batch, (B, T), 0, V, dtype=jnp.int32)

    # Deterministic synthetic "trained counts", row-normalized (normalize_cnts()).
    u_cnt = jax.random.uniform(k_u, (V,), jnp.float32) + 0.5
    unigram = u_cnt / jnp.sum(u_cnt)
    b_cnt = jax.random.uniform(k_b, (V, V), jnp.float32) + 0.5
    bigram = b_cnt / jnp.sum(b_cnt, axis=-1, keepdims=True)
    t_cnt = jax.random.uniform(k_t, (V * V, V), jnp.float32) + 0.5
    trigram_flat = t_cnt / jnp.sum(t_cnt, axis=-1, keepdims=True)

    alphas = (0.2, 0.3, 0.5)   # set_alpha(0.2, 0.3) -> [0.2, 0.3, 0.5]

    out = trigram_forward(batch, unigram, bigram, trigram_flat, alphas)
    out = jax.block_until_ready(out)

    ref = _reference(batch, unigram, bigram, trigram_flat, alphas)
    assert out.shape == (B, T, V) and out.dtype == jnp.float32
    assert jnp.allclose(out, ref, atol=1e-5, rtol=1e-5), "mismatch vs reference"

    print("KERNEL_OK")
</pallas_src>

<mosaic_0001>
module attributes {stable_mosaic.version = 11 : i64} {
  func.func @_trigram_kernel_vmem(%arg0: i32, %arg1: memref<16xi32, #tpu.memory_space<smem>>, %arg2: memref<16xi32, #tpu.memory_space<smem>>, %arg3: memref<1x128xf32, #tpu.memory_space<vmem>>, %arg4: memref<129x128xf32, #tpu.memory_space<vmem>>, %arg5: memref<16385x128xf32, #tpu.memory_space<vmem>>, %arg6: memref<16x128xf32, #tpu.memory_space<vmem>>, %arg7: memref<16x128xf32, #tpu.memory_space<vmem>>, %arg8: memref<16x128xf32, #tpu.memory_space<vmem>>) attributes {dimension_semantics = [#tpu.dimension_semantics<parallel>], iteration_bounds = array<i64: 1>, scalar_prefetch = 2 : i64, scratch_operands = 2 : i64, tpu.core_type = #tpu.core_type<tc>, window_params = [{pipeline_mode = #tpu.pipeline_mode<synchronous>, transform_indices = @transform_0, window_bounds = array<i64: 1, 128>}, {pipeline_mode = #tpu.pipeline_mode<synchronous>, transform_indices = @transform_1, window_bounds = array<i64: 129, 128>}, {pipeline_mode = #tpu.pipeline_mode<synchronous>, transform_indices = @transform_2, window_bounds = array<i64: 16385, 128>}, {transform_indices = @transform_3, window_bounds = array<i64: 16, 128>}]} {
    %c16_i32 = arith.constant 16 : i32
    %0 = arith.muli %arg0, %c16_i32 : i32
    %c0_i32 = arith.constant 0 : i32
    %c2_i32 = arith.constant 2 : i32
    %1 = arith.addi %c0_i32, %c2_i32 : i32
    %c1_i32 = arith.constant 1 : i32
    scf.for %arg9 = %c0_i32 to %1 step %c1_i32  : i32 {
      %c1_i32_8 = arith.constant 1 : i32
      %10 = arith.muli %arg9, %c1_i32_8 : i32
      %c0_i32_9 = arith.constant 0 : i32
      %11 = arith.addi %c0_i32_9, %10 : i32
      %c8_i32 = arith.constant 8 : i32
      %12 = arith.muli %11, %c8_i32 : i32
      %13 = tpu.assume_multiple %12, 8 : i32
      %c0_i32_10 = arith.constant 0 : i32
      %14 = arith.addi %13, %c0_i32_10 : i32
      %15 = arith.addi %0, %14 : i32
      %16 = arith.index_cast %15 : i32 to index
      %17 = memref.load %arg1[%16] : memref<16xi32, #tpu.memory_space<smem>>
      %18 = arith.addi %0, %14 : i32
      %19 = arith.index_cast %18 : i32 to index
      %20 = memref.load %arg2[%19] : memref<16xi32, #tpu.memory_space<smem>>
      %21 = arith.index_cast %17 : i32 to index
      %c0_11 = arith.constant 0 : index
      %22 = vector.load %arg4[%21, %c0_11] : memref<129x128xf32, #tpu.memory_space<vmem>>, vector<1x128xf32>
      %23 = arith.index_cast %14 : i32 to index
      %c0_12 = arith.constant 0 : index
      %24 = vector.load %arg7[%23, %c0_12] : memref<16x128xf32, #tpu.memory_space<vmem>>, vector<1x128xf32>
      tpu.vector_store %arg7[%23, %c0_12], %22 {strides = array<i32>} : memref<16x128xf32, #tpu.memory_space<vmem>>, vector<1x128xf32>,
      %25 = arith.index_cast %20 : i32 to index
      %c0_13 = arith.constant 0 : index
      %26 = vector.load %arg5[%25, %c0_13] : memref<16385x128xf32, #tpu.memory_space<vmem>>, vector<1x128xf32>
      %27 = arith.index_cast %14 : i32 to index
      %c0_14 = arith.constant 0 : index
      %28 = vector.load %arg8[%27, %c0_14] : memref<16x128xf32, #tpu.memory_space<vmem>>, vector<1x128xf32>
      tpu.vector_store %arg8[%27, %c0_14], %26 {strides = array<i32>} : memref<16x128xf32, #tpu.memory_space<vmem>>, vector<1x128xf32>,
      %c1_i32_15 = arith.constant 1 : i32
      %29 = arith.addi %13, %c1_i32_15 : i32
      %30 = arith.addi %0, %29 : i32
      %31 = arith.index_cast %30 : i32 to index
      %32 = memref.load %arg1[%31] : memref<16xi32, #tpu.memory_space<smem>>
      %33 = arith.addi %0, %29 : i32
      %34 = arith.index_cast %33 : i32 to index
      %35 = memref.load %arg2[%34] : memref<16xi32, #tpu.memory_space<smem>>
      %36 = arith.index_cast %32 : i32 to index
      %c0_16 = arith.constant 0 : index
      %37 = vector.load %arg4[%36, %c0_16] : memref<129x128xf32, #tpu.memory_space<vmem>>, vector<1x128xf32>
      %38 = arith.index_cast %29 : i32 to index
      %c0_17 = arith.constant 0 : index
      %39 = vector.load %arg7[%38, %c0_17] : memref<16x128xf32, #tpu.memory_space<vmem>>, vector<1x128xf32>
      tpu.vector_store %arg7[%38, %c0_17], %37 {strides = array<i32>} : memref<16x128xf32, #tpu.memory_space<vmem>>, vector<1x128xf32>,
      %40 = arith.index_cast %35 : i32 to index
      %c0_18 = arith.constant 0 : index
      %41 = vector.load %arg5[%40, %c0_18] : memref<16385x128xf32, #tpu.memory_space<vmem>>, vector<1x128xf32>
      %42 = arith.index_cast %29 : i32 to index
      %c0_19 = arith.constant 0 : index
      %43 = vector.load %arg8[%42, %c0_19] : memref<16x128xf32, #tpu.memory_space<vmem>>, vector<1x128xf32>
      tpu.vector_store %arg8[%42, %c0_19], %41 {strides = array<i32>} : memref<16x128xf32, #tpu.memory_space<vmem>>, vector<1x128xf32>,
      %c2_i32_20 = arith.constant 2 : i32
      %44 = arith.addi %13, %c2_i32_20 : i32
      %45 = arith.addi %0, %44 : i32
      %46 = arith.index_cast %45 : i32 to index
      %47 = memref.load %arg1[%46] : memref<16xi32, #tpu.memory_space<smem>>
      %48 = arith.addi %0, %44 : i32
      %49 = arith.index_cast %48 : i32 to index
      %50 = memref.load %arg2[%49] : memref<16xi32, #tpu.memory_space<smem>>
      %51 = arith.index_cast %47 : i32 to index
      %c0_21 = arith.constant 0 : index
      %52 = vector.load %arg4[%51, %c0_21] : memref<129x128xf32, #tpu.memory_space<vmem>>, vector<1x128xf32>
      %53 = arith.index_cast %44 : i32 to index
      %c0_22 = arith.constant 0 : index
      %54 = vector.load %arg7[%53, %c0_22] : memref<16x128xf32, #tpu.memory_space<vmem>>, vector<1x128xf32>
      tpu.vector_store %arg7[%53, %c0_22], %52 {strides = array<i32>} : memref<16x128xf32, #tpu.memory_space<vmem>>, vector<1x128xf32>,
      %55 = arith.index_cast %50 : i32 to index
      %c0_23 = arith.constant 0 : index
      %56 = vector.load %arg5[%55, %c0_23] : memref<16385x128xf32, #tpu.memory_space<vmem>>, vector<1x128xf32>
      %57 = arith.index_cast %44 : i32 to index
      %c0_24 = arith.constant 0 : index
      %58 = vector.load %arg8[%57, %c0_24] : memref<16x128xf32, #tpu.memory_space<vmem>>, vector<1x128xf32>
      tpu.vector_store %arg8[%57, %c0_24], %56 {strides = array<i32>} : memref<16x128xf32, #tpu.memory_space<vmem>>, vector<1x128xf32>,
      %c3_i32 = arith.constant 3 : i32
      %59 = arith.addi %13, %c3_i32 : i32
      %60 = arith.addi %0, %59 : i32
      %61 = arith.index_cast %60 : i32 to index
      %62 = memref.load %arg1[%61] : memref<16xi32, #tpu.memory_space<smem>>
      %63 = arith.addi %0, %59 : i32
      %64 = arith.index_cast %63 : i32 to index
      %65 = memref.load %arg2[%64] : memref<16xi32, #tpu.memory_space<smem>>
      %66 = arith.index_cast %62 : i32 to index
      %c0_25 = arith.constant 0 : index
      %67 = vector.load %arg4[%66, %c0_25] : memref<129x128xf32, #tpu.memory_space<vmem>>, vector<1x128xf32>
      %68 = arith.index_cast %59 : i32 to index
      %c0_26 = arith.constant 0 : index
      %69 = vector.load %arg7[%68, %c0_26] : memref<16x128xf32, #tpu.memory_space<vmem>>, vector<1x128xf32>
      tpu.vector_store %arg7[%68, %c0_26], %67 {strides = array<i32>} : memref<16x128xf32, #tpu.memory_space<vmem>>, vector<1x128xf32>,
      %70 = arith.index_cast %65 : i32 to index
      %c0_27 = arith.constant 0 : index
      %71 = vector.load %arg5[%70, %c0_27] : memref<16385x128xf32, #tpu.memory_space<vmem>>, vector<1x128xf32>
      %72 = arith.index_cast %59 : i32 to index
      %c0_28 = arith.constant 0 : index
      %73 = vector.load %arg8[%72, %c0_28] : memref<16x128xf32, #tpu.memory_space<vmem>>, vector<1x128xf32>
      tpu.vector_store %arg8[%72, %c0_28], %71 {strides = array<i32>} : memref<16x128xf32, #tpu.memory_space<vmem>>, vector<1x128xf32>,
      %c4_i32 = arith.constant 4 : i32
      %74 = arith.addi %13, %c4_i32 : i32
      %75 = arith.addi %0, %74 : i32
      %76 = arith.index_cast %75 : i32 to index
      %77 = memref.load %arg1[%76] : memref<16xi32, #tpu.memory_space<smem>>
      %78 = arith.addi %0, %74 : i32
      %79 = arith.index_cast %78 : i32 to index
      %80 = memref.load %arg2[%79] : memref<16xi32, #tpu.memory_space<smem>>
      %81 = arith.index_cast %77 : i32 to index
      %c0_29 = arith.constant 0 : index
      %82 = vector.load %arg4[%81, %c0_29] : memref<129x128xf32, #tpu.memory_space<vmem>>, vector<1x128xf32>
      %83 = arith.index_cast %74 : i32 to index
      %c0_30 = arith.constant 0 : index
      %84 = vector.load %arg7[%83, %c0_30] : memref<16x128xf32, #tpu.memory_space<vmem>>, vector<1x128xf32>
      tpu.vector_store %arg7[%83, %c0_30], %82 {strides = array<i32>} : memref<16x128xf32, #tpu.memory_space<vmem>>, vector<1x128xf32>,
      %85 = arith.index_cast %80 : i32 to index
      %c0_31 = arith.constant 0 : index
      %86 = vector.load %arg5[%85, %c0_31] : memref<16385x128xf32, #tpu.memory_space<vmem>>, vector<1x128xf32>
      %87 = arith.index_cast %74 : i32 to index
      %c0_32 = arith.constant 0 : index
      %88 = vector.load %arg8[%87, %c0_32] : memref<16x128xf32, #tpu.memory_space<vmem>>, vector<1x128xf32>
      tpu.vector_store %arg8[%87, %c0_32], %86 {strides = array<i32>} : memref<16x128xf32, #tpu.memory_space<vmem>>, vector<1x128xf32>,
      %c5_i32 = arith.constant 5 : i32
      %89 = arith.addi %13, %c5_i32 : i32
      %90 = arith.addi %0, %89 : i32
      %91 = arith.index_cast %90 : i32 to index
      %92 = memref.load %arg1[%91] : memref<16xi32, #tpu.memory_space<smem>>
      %93 = arith.addi %0, %89 : i32
      %94 = arith.index_cast %93 : i32 to index
      %95 = memref.load %arg2[%94] : memref<16xi32, #tpu.memory_space<smem>>
      %96 = arith.index_cast %92 : i32 to index
      %c0_33 = arith.constant 0 : index
      %97 = vector.load %arg4[%96, %c0_33] : memref<129x128xf32, #tpu.memory_space<vmem>>, vector<1x128xf32>
      %98 = arith.index_cast %89 : i32 to index
      %c0_34 = arith.constant 0 : index
      %99 = vector.load %arg7[%98, %c0_34] : memref<16x128xf32, #tpu.memory_space<vmem>>, vector<1x128xf32>
      tpu.vector_store %arg7[%98, %c0_34], %97 {strides = array<i32>} : memref<16x128xf32, #tpu.memory_space<vmem>>, vector<1x128xf32>,
      %100 = arith.index_cast %95 : i32 to index
      %c0_35 = arith.constant 0 : index
      %101 = vector.load %arg5[%100, %c0_35] : memref<16385x128xf32, #tpu.memory_space<vmem>>, vector<1x128xf32>
      %102 = arith.index_cast %89 : i32 to index
      %c0_36 = arith.constant 0 : index
      %103 = vector.load %arg8[%102, %c0_36] : memref<16x128xf32, #tpu.memory_space<vmem>>, vector<1x128xf32>
      tpu.vector_store %arg8[%102, %c0_36], %101 {strides = array<i32>} : memref<16x128xf32, #tpu.memory_space<vmem>>, vector<1x128xf32>,
      %c6_i32 = arith.constant 6 : i32
      %104 = arith.addi %13, %c6_i32 : i32
      %105 = arith.addi %0, %104 : i32
      %106 = arith.index_cast %105 : i32 to index
      %107 = memref.load %arg1[%106] : memref<16xi32, #tpu.memory_space<smem>>
      %108 = arith.addi %0, %104 : i32
      %109 = arith.index_cast %108 : i32 to index
      %110 = memref.load %arg2[%109] : memref<16xi32, #tpu.memory_space<smem>>
      %111 = arith.index_cast %107 : i32 to index
      %c0_37 = arith.constant 0 : index
      %112 = vector.load %arg4[%111, %c0_37] : memref<129x128xf32, #tpu.memory_space<vmem>>, vector<1x128xf32>
      %113 = arith.index_cast %104 : i32 to index
      %c0_38 = arith.constant 0 : index
      %114 = vector.load %arg7[%113, %c0_38] : memref<16x128xf32, #tpu.memory_space<vmem>>, vector<1x128xf32>
      tpu.vector_store %arg7[%113, %c0_38], %112 {strides = array<i32>} : memref<16x128xf32, #tpu.memory_space<vmem>>, vector<1x128xf32>,
      %115 = arith.index_cast %110 : i32 to index
      %c0_39 = arith.constant 0 : index
      %116 = vector.load %arg5[%115, %c0_39] : memref<16385x128xf32, #tpu.memory_space<vmem>>, vector<1x128xf32>
      %117 = arith.index_cast %104 : i32 to index
      %c0_40 = arith.constant 0 : index
      %118 = vector.load %arg8[%117, %c0_40] : memref<16x128xf32, #tpu.memory_space<vmem>>, vector<1x128xf32>
      tpu.vector_store %arg8[%117, %c0_40], %116 {strides = array<i32>} : memref<16x128xf32, #tpu.memory_space<vmem>>, vector<1x128xf32>,
      %c7_i32 = arith.constant 7 : i32
      %119 = arith.addi %13, %c7_i32 : i32
      %120 = arith.addi %0, %119 : i32
      %121 = arith.index_cast %120 : i32 to index
      %122 = memref.load %arg1[%121] : memref<16xi32, #tpu.memory_space<smem>>
      %123 = arith.addi %0, %119 : i32
      %124 = arith.index_cast %123 : i32 to index
      %125 = memref.load %arg2[%124] : memref<16xi32, #tpu.memory_space<smem>>
      %126 = arith.index_cast %122 : i32 to index
      %c0_41 = arith.constant 0 : index
      %127 = vector.load %arg4[%126, %c0_41] : memref<129x128xf32, #tpu.memory_space<vmem>>, vector<1x128xf32>
      %128 = arith.index_cast %119 : i32 to index
      %c0_42 = arith.constant 0 : index
      %129 = vector.load %arg7[%128, %c0_42] : memref<16x128xf32, #tpu.memory_space<vmem>>, vector<1x128xf32>
      tpu.vector_store %arg7[%128, %c0_42], %127 {strides = array<i32>} : memref<16x128xf32, #tpu.memory_space<vmem>>, vector<1x128xf32>,
      %130 = arith.index_cast %125 : i32 to index
      %c0_43 = arith.constant 0 : index
      %131 = vector.load %arg5[%130, %c0_43] : memref<16385x128xf32, #tpu.memory_space<vmem>>, vector<1x128xf32>
      %132 = arith.index_cast %119 : i32 to index
      %c0_44 = arith.constant 0 : index
      %133 = vector.load %arg8[%132, %c0_44] : memref<16x128xf32, #tpu.memory_space<vmem>>, vector<1x128xf32>
      tpu.vector_store %arg8[%132, %c0_44], %131 {strides = array<i32>} : memref<16x128xf32, #tpu.memory_space<vmem>>, vector<1x128xf32>,
    }
    %c2_i32_0 = arith.constant 2 : i32
    %c0 = arith.constant 0 : index
    %c0_1 = arith.constant 0 : index
    %2 = vector.load %arg3[%c0, %c0_1] : memref<1x128xf32, #tpu.memory_space<vmem>>, vector<1x128xf32>
    %c0_2 = arith.constant 0 : index
    %c0_3 = arith.constant 0 : index
    %3 = vector.load %arg7[%c0_2, %c0_3] : memref<16x128xf32, #tpu.memory_space<vmem>>, vector<16x128xf32>
    %4 = vector.broadcast %2 : vector<1x128xf32> to vector<16x128xf32>
    %5 = arith.addf %4, %3 : vector<16x128xf32>
    %c0_4 = arith.constant 0 : index
    %c0_5 = arith.constant 0 : index
    %6 = vector.load %arg8[%c0_4, %c0_5] : memref<16x128xf32, #tpu.memory_space<vmem>>, vector<16x128xf32>
    %7 = arith.addf %5, %6 : vector<16x128xf32>
    %8 = math.log %7 : vector<16x128xf32>
    %c0_6 = arith.constant 0 : index
    %c0_7 = arith.constant 0 : index
    %9 = vector.load %arg6[%c0_6, %c0_7] : memref<16x128xf32, #tpu.memory_space<vmem>>, vector<16x128xf32>
    tpu.vector_store %arg6[%c0_6, %c0_7], %8 {strides = array<i32>} : memref<16x128xf32, #tpu.memory_space<vmem>>, vector<16x128xf32>,
    return
  }
  func.func @transform_0(%arg0: i32, %arg1: memref<16xi32, #tpu.memory_space<smem>>, %arg2: memref<16xi32, #tpu.memory_space<smem>>) -> (i32, i32) {
    %c0_i32 = arith.constant 0 : i32
    %c0_i32_0 = arith.constant 0 : i32
    %c0_i32_1 = arith.constant 0 : i32
    return %c0_i32, %c0_i32_0 : i32, i32
  }
  func.func @transform_1(%arg0: i32, %arg1: memref<16xi32, #tpu.memory_space<smem>>, %arg2: memref<16xi32, #tpu.memory_space<smem>>) -> (i32, i32) {
    %c0_i32 = arith.constant 0 : i32
    %c0_i32_0 = arith.constant 0 : i32
    %c0_i32_1 = arith.constant 0 : i32
    return %c0_i32, %c0_i32_0 : i32, i32
  }
  func.func @transform_2(%arg0: i32, %arg1: memref<16xi32, #tpu.memory_space<smem>>, %arg2: memref<16xi32, #tpu.memory_space<smem>>) -> (i32, i32) {
    %c0_i32 = arith.constant 0 : i32
    %c0_i32_0 = arith.constant 0 : i32
    %c0_i32_1 = arith.constant 0 : i32
    return %c0_i32, %c0_i32_0 : i32, i32
  }
  func.func @transform_3(%arg0: i32, %arg1: memref<16xi32, #tpu.memory_space<smem>>, %arg2: memref<16xi32, #tpu.memory_space<smem>>) -> (i32, i32) {
    %c0_i32 = arith.constant 0 : i32
    %c0_i32_0 = arith.constant 0 : i32
    return %arg0, %c0_i32 : i32, i32
  }
}

</mosaic_0001>

<llo_original>
// kernel: tpu_custom_call.1
$region0: #{tpu_custom_call.1}
  #allocation0 [shape = 'u32[]', space=smem, size = 0x4, offset = 0x4, fixed_abs, tag = 'smem constant byte address 0x4 - core index']
  #allocation1 [shape = 'u32[144,128]{1,0:T(1,128)}', space=vmem, size = 0x12000, scoped, tag = 'internal scratch']
  #allocation2 [shape = 'f32[16,128]{1,0:T(8,128)}', space=vmem, size = 0x2000, scoped, tag = 'scratch operand']
  #allocation3 [shape = 'f32[16,128]{1,0:T(8,128)}', space=vmem, size = 0x2000, scoped, tag = 'scratch operand']
  #allocation4 [shape = 's32[1]{0}', space=sflag, size = 0x4, scoped, tag = 'scoped memory for tpu_custom_call.1']
  #allocation5 [shape = 'u8[512]{0}', space=smem, size = 0x200, scoped, tag = 'prefetched SMEM operand 0']
  #allocation6 [shape = 'u8[512]{0}', space=smem, size = 0x200, scoped, tag = 'prefetched SMEM operand 1']
  %s0 = inlined_call_operand.hbm [shape: s32[16], index: 0, kind: input, shape index: {}]
  %s1 = inlined_call_operand.hbm [shape: s32[16], index: 1, kind: input, shape index: {}]
  %s2 = inlined_call_operand.hbm [shape: f32[1,128], index: 2, kind: input, shape index: {}]
  %s3 = inlined_call_operand.hbm [shape: f32[129,128], index: 3, kind: input, shape index: {}]
  %s4 = inlined_call_operand.hbm [shape: f32[16385,128], index: 4, kind: input, shape index: {}]
  %s5 = inlined_call_operand.hbm [shape: f32[16,128], index: 5, kind: output, shape index: {}]
  %s6 = sld [smem:[#allocation0]]
  $region41: #{tpu_custom_call.1} parent=0
    _
  %s8 = ssub.s32 1, %s6
  %s9 = scalar_select 0, %s8, %s6
  %11 = dma.hbm_to_smem %s0, 16, [#allocation5], [#allocation4]
  %13 = dma.hbm_to_smem %s1, 16, [#allocation6], [#allocation4]
  %14 = dma.done [#allocation4], 32
  %15 = sfence
  $region1: #{tpu_custom_call.1} parent=0
    #allocation7 [shape = 'u8[512]{0}', space=vmem, size = 0x400, scoped, tag = 'input window, operand 2, single buffered']
    #allocation8 [shape = 's32[1]{0}', space=sflag, size = 0x4, scoped, tag = 'scoped memory for tpu_custom_call.1']
    #allocation9 [shape = 's32[1]{0}', space=sflag, size = 0x4, scoped, tag = 'scoped memory for tpu_custom_call.1']
    #allocation10 [shape = 'u8[69632]{0}', space=vmem, size = 0x11000, scoped, tag = 'input window, operand 3, single buffered']
    #allocation11 [shape = 's32[1]{0}', space=sflag, size = 0x4, scoped, tag = 'scoped memory for tpu_custom_call.1']
    #allocation12 [shape = 'u8[8392704]{0}', space=vmem, size = 0x801000, scoped, tag = 'input window, operand 4, single buffered']
    #allocation13 [shape = 'u8[8192]{0}', space=vmem, size = 0x2000, scoped, tag = 'output window, operand 0, single buffered']
    %16 = vsyncpa [#allocation8], 0
    %17 = vsyncpa [#allocation11], 0
    %18 = vsyncpa [#allocation9], 0
    // Predicated region
    $region2: #{tpu_custom_call.1} parent=1 // pred_check
      _
    $region3: #{tpu_custom_call.1} parent=1 // pred_check_branch
      %20 = sbr.rel (0) target = $region5
    $region4: #{tpu_custom_call.1} parent=1 // pred_region
      %s22 = ssub.s32 16, 16
      %23 = vsyncadd [#allocation8], %s22
      %s25 = sshll.u32 [#allocation7], 4
      %s26 = int_to_ptr.vmem [resolvable:$true] %s25
      %28 = dma.hbm_to_vmem [thread:$0]  %s2, 16, %s26, [#allocation8]
    $region5: #{tpu_custom_call.1} parent=1 // pred_fallthru
      _
    // Predicated region
    $region6: #{tpu_custom_call.1} parent=1 // pred_check
      _
    $region7: #{tpu_custom_call.1} parent=1 // pred_check_branch
      %30 = sbr.rel (0) target = $region9
    $region8: #{tpu_custom_call.1} parent=1 // pred_region
      %s32 = ssub.s32 2176, 2176
      %33 = vsyncadd [#allocation11], %s32
      %s34 = sshll.u32 [#allocation10], 4
      %s35 = int_to_ptr.vmem [resolvable:$true] %s34
      %40 = dma.hbm_to_vmem [thread:$0]  %s3, 2176, %s35, [#allocation11], 128, 128, 8
    $region9: #{tpu_custom_call.1} parent=1 // pred_fallthru
      _
    // Predicated region
    $region10: #{tpu_custom_call.1} parent=1 // pred_check
      _
    $region11: #{tpu_custom_call.1} parent=1 // pred_check_branch
      %42 = sbr.rel (0) target = $region13
    $region12: #{tpu_custom_call.1} parent=1 // pred_region
      %s44 = ssub.s32 262272, 262272
      %45 = vsyncadd [#allocation11], %s44
      %s46 = sshll.u32 [#allocation12], 4
      %s47 = int_to_ptr.vmem [resolvable:$true] %s46
      %52 = dma.hbm_to_vmem [thread:$0]  %s4, 262272, %s47, [#allocation11], 128, 128, 8
    $region13: #{tpu_custom_call.1} parent=1 // pred_fallthru
      _
    // Predicated region
    $region14: #{tpu_custom_call.1} parent=1 // pred_check
      _
    $region15: #{tpu_custom_call.1} parent=1 // pred_check_branch
      %54 = sbr.rel (0) target = $region17
    $region16: #{tpu_custom_call.1} parent=1 // pred_region
      %55 = dma.done [#allocation8], 16
    $region17: #{tpu_custom_call.1} parent=1 // pred_fallthru
      _
    // Predicated region
    $region18: #{tpu_custom_call.1} parent=1 // pred_check
      _
    $region19: #{tpu_custom_call.1} parent=1 // pred_check_branch
      %57 = sbr.rel (0) target = $region21
    $region20: #{tpu_custom_call.1} parent=1 // pred_region
      %58 = dma.done [#allocation11], 2176
    $region21: #{tpu_custom_call.1} parent=1 // pred_fallthru
      _
    // Predicated region
    $region22: #{tpu_custom_call.1} parent=1 // pred_check
      _
    $region23: #{tpu_custom_call.1} parent=1 // pred_check_branch
      %60 = sbr.rel (0) target = $region25
    $region24: #{tpu_custom_call.1} parent=1 // pred_region
      %61 = dma.done [#allocation11], 262272
    $region25: #{tpu_custom_call.1} parent=1 // pred_fallthru
      _
    %s62 = smul.u32 0, 16
    loop: start=0, step=1, limit=2
    $region26: #{tpu_custom_call.1} parent=1 // loop_pre_header
      _
    $region27: #{tpu_custom_call.1} parent=1 // loop_header
      %s64 = sphi 0, %s68
      %p65 = scmp.ge.s32.totalorder %s64, 2
    $region28: #{tpu_custom_call.1} parent=1 // loop_header_branch
      %67 = sbr.rel (%p65) target = $region32
    $region29: #{tpu_custom_call.1} parent=1 // loop_body
      %s69 = smul.u32 %s64, 8
      %s70 = sadd.s32 %s62, %s69
      %s71 = sld [smem:[#allocation5 + %s70]]
      %s72 = sld [smem:[#allocation6 + %s70]]
      %s73 = scalar_lea.vmem [#allocation10], %s71
      %v74 = vld [vmem:[%s73] sm:$0x1]
      %s75 = scalar_lea.vmem [#allocation2], %s69
      %76 = vst [vmem:[%s75] sm:$0x1] %v74
      %s77 = scalar_lea.vmem [#allocation12], %s72
      %v78 = vld [vmem:[%s77] sm:$0x1]
      %s79 = scalar_lea.vmem [#allocation3], %s69
      %80 = vst [vmem:[%s79] sm:$0x1] %v78
      %s81 = sadd.s32 %s69, 1
      %s82 = sadd.s32 %s62, %s81
      %s83 = sld [smem:[#allocation5 + %s82]]
      %s84 = sld [smem:[#allocation6 + %s82]]
      %s85 = scalar_lea.vmem [#allocation10], %s83
      %v86 = vld [vmem:[%s85] sm:$0x1]
      %s87 = scalar_lea.vmem [#allocation2], %s81
      %88 = vst [vmem:[%s87] sm:$0x1] %v86
      %s89 = scalar_lea.vmem [#allocation12], %s84
      %v90 = vld [vmem:[%s89] sm:$0x1]
      %s91 = scalar_lea.vmem [#allocation3], %s81
      %92 = vst [vmem:[%s91] sm:$0x1] %v90
      %s93 = sadd.s32 %s69, 2
      %s94 = sadd.s32 %s62, %s93
      %s95 = sld [smem:[#allocation5 + %s94]]
      %s96 = sld [smem:[#allocation6 + %s94]]
      %s97 = scalar_lea.vmem [#allocation10], %s95
      %v98 = vld [vmem:[%s97] sm:$0x1]
      %s99 = scalar_lea.vmem [#allocation2], %s93
      %100 = vst [vmem:[%s99] sm:$0x1] %v98
      %s101 = scalar_lea.vmem [#allocation12], %s96
      %v102 = vld [vmem:[%s101] sm:$0x1]
      %s103 = scalar_lea.vmem [#allocation3], %s93
      %104 = vst [vmem:[%s103] sm:$0x1] %v102
      %s105 = sadd.s32 %s69, 3
      %s106 = sadd.s32 %s62, %s105
      %s107 = sld [smem:[#allocation5 + %s106]]
      %s108 = sld [smem:[#allocation6 + %s106]]
      %s109 = scalar_lea.vmem [#allocation10], %s107
      %v110 = vld [vmem:[%s109] sm:$0x1]
      %s111 = scalar_lea.vmem [#allocation2], %s105
      %112 = vst [vmem:[%s111] sm:$0x1] %v110
      %s113 = scalar_lea.vmem [#allocation12], %s108
      %v114 = vld [vmem:[%s113] sm:$0x1]
      %s115 = scalar_lea.vmem [#allocation3], %s105
      %116 = vst [vmem:[%s115] sm:$0x1] %v114
      %s117 = sadd.s32 %s69, 4
      %s118 = sadd.s32 %s62, %s117
      %s119 = sld [smem:[#allocation5 + %s118]]
      %s120 = sld [smem:[#allocation6 + %s118]]
      %s121 = scalar_lea.vmem [#allocation10], %s119
      %v122 = vld [vmem:[%s121] sm:$0x1]
      %s123 = scalar_lea.vmem [#allocation2], %s117
      %124 = vst [vmem:[%s123] sm:$0x1] %v122
      %s125 = scalar_lea.vmem [#allocation12], %s120
      %v126 = vld [vmem:[%s125] sm:$0x1]
      %s127 = scalar_lea.vmem [#allocation3], %s117
      %128 = vst [vmem:[%s127] sm:$0x1] %v126
      %s129 = sadd.s32 %s69, 5
      %s130 = sadd.s32 %s62, %s129
      %s131 = sld [smem:[#allocation5 + %s130]]
      %s132 = sld [smem:[#allocation6 + %s130]]
      %s133 = scalar_lea.vmem [#allocation10], %s131
      %v134 = vld [vmem:[%s133] sm:$0x1]
      %s135 = scalar_lea.vmem [#allocation2], %s129
      %136 = vst [vmem:[%s135] sm:$0x1] %v134
      %s137 = scalar_lea.vmem [#allocation12], %s132
      %v138 = vld [vmem:[%s137] sm:$0x1]
      %s139 = scalar_lea.vmem [#allocation3], %s129
      %140 = vst [vmem:[%s139] sm:$0x1] %v138
      %s141 = sadd.s32 %s69, 6
      %s142 = sadd.s32 %s62, %s141
      %s143 = sld [smem:[#allocation5 + %s142]]
      %s144 = sld [smem:[#allocation6 + %s142]]
      %s145 = scalar_lea.vmem [#allocation10], %s143
      %v146 = vld [vmem:[%s145] sm:$0x1]
      %s147 = scalar_lea.vmem [#allocation2], %s141
      %148 = vst [vmem:[%s147] sm:$0x1] %v146
      %s149 = scalar_lea.vmem [#allocation12], %s144
      %v150 = vld [vmem:[%s149] sm:$0x1]
      %s151 = scalar_lea.vmem [#allocation3], %s141
      %152 = vst [vmem:[%s151] sm:$0x1] %v150
      %s153 = sadd.s32 %s69, 7
      %s154 = sadd.s32 %s62, %s153
      %s155 = sld [smem:[#allocation5 + %s154]]
      %s156 = sld [smem:[#allocation6 + %s154]]
      %s157 = scalar_lea.vmem [#allocation10], %s155
      %v158 = vld [vmem:[%s157] sm:$0x1]
      %s159 = scalar_lea.vmem [#allocation2], %s153
      %160 = vst [vmem:[%s159] sm:$0x1] %v158
      %s161 = scalar_lea.vmem [#allocation12], %s156
      %v162 = vld [vmem:[%s161] sm:$0x1]
      %s163 = scalar_lea.vmem [#allocation3], %s153
      %164 = vst [vmem:[%s163] sm:$0x1] %v162
    $region30: #{tpu_custom_call.1} parent=1 // loop_footer
      %s68 = sadd.s32 1, %s64
    $region31: #{tpu_custom_call.1} parent=1 // loop_footer_branch
      %63 = sbr.rel target = $region27
    $region32: #{tpu_custom_call.1} parent=1 // loop_exit
      _
    %v165 = vld [vmem:[#allocation7] sm:$0x1]
    %v166 = vld [vmem:[#allocation2] sm:$0xff]
    %v167 = vld [vmem:[#allocation2 + $0x8] sm:$0xff]
    %v169 = vlaneseq
    %v170 = vshrl.u32 %v169, 7
    %v171 = vsub.s32 0, %v170
    %v172 = vrot.slane %v165, %v171
    %v174 = vadd.f32 %v172, %v166
    %v175 = vadd.f32 %v172, %v167
    %v176 = vld [vmem:[#allocation3] sm:$0xff]
    %v177 = vld [vmem:[#allocation3 + $0x8] sm:$0xff]
    %v178 = vadd.f32 %v174, %v176
    %v179 = vadd.f32 %v175, %v177
    %v180 = vlog2.pop %v178
    %v181 = vmul.f32 %v180, 0.6931472
    %v182 = vlog2.pop %v179
    %v183 = vmul.f32 %v182, 0.6931472
    %184 = vst [vmem:[#allocation13] sm:$0xff] %v181
    %185 = vst [vmem:[#allocation13 + $0x8] sm:$0xff] %v183
    // Predicated region
    $region33: #{tpu_custom_call.1} parent=1 // pred_check
      _
    $region34: #{tpu_custom_call.1} parent=1 // pred_check_branch
      %187 = sbr.rel (0) target = $region36
    $region35: #{tpu_custom_call.1} parent=1 // pred_region
      %s189 = ssub.s32 256, 256
      %190 = vsyncadd [#allocation9], %s189
      %s191 = sshll.u32 [#allocation13], 4
      %s192 = int_to_ptr.vmem [resolvable:$true] %s191
      %197 = dma.vmem_to_hbm [thread:$0]  %s192, 256, %s5, [#allocation9], 128, 128, 8
    $region36: #{tpu_custom_call.1} parent=1 // pred_fallthru
      _
    // Predicated region
    $region37: #{tpu_custom_call.1} parent=1 // pred_check
      _
    $region38: #{tpu_custom_call.1} parent=1 // pred_check_branch
      %199 = sbr.rel (0) target = $region40
    $region39: #{tpu_custom_call.1} parent=1 // pred_region
      %200 = dma.done [#allocation9], 256
    $region40: #{tpu_custom_call.1} parent=1 // pred_fallthru
      _
    %201 = vsyncpa [#allocation8], 1
    %202 = vsyncpa [#allocation11], 1
    %203 = vsyncpa [#allocation9], 1

</llo_original>
